<compile_context>
chip_gen: v6e
topology: v6e:2x2x1
jax: 0.10.0
libtpu: 0.0.40
codegen_flags: <defaults>
</compile_context>

<pallas_src>
import jax
import jax.numpy as jnp
from jax.experimental import pallas as pl
from jax.experimental.pallas import tpu as pltpu

_LANES = 128                      # vreg lane width
_MAX_WIDTH = 8192                 # widest lane-dense last dim we present
_TILE_BYTES = 2 * 1024 * 1024     # ~2 MiB per input tile (x2 in/out, x2 buffered = 8 MiB)
_MIN_PALLAS_BYTES = 1 << 20       # below this, a pallas_call is pure launch overhead


def _copy_kernel(x_ref, o_ref):
    # Elementwise copy of the current tile (pure HBM<->VMEM streaming).
    o_ref[...] = x_ref[...]


def _pick_width(n_padded: int) -> int:
    """Largest multiple of 128 that divides n_padded, capped at _MAX_WIDTH."""
    chunks = n_padded // _LANES
    for d in range(min(_MAX_WIDTH // _LANES, chunks), 0, -1):
        if chunks % d == 0:
            return d * _LANES
    return _LANES


def identity_representation(x: jnp.ndarray) -> jnp.ndarray:
    """IdentityRepresentation.forward: pure passthrough (zero cost)."""
    return x


def identity_copy_pallas(x: jnp.ndarray, *,
                         min_pallas_bytes: int = _MIN_PALLAS_BYTES) -> jnp.ndarray:
    """Explicit materializing identity copy via a lane-dense, tiled Pallas kernel."""
    orig_shape = x.shape
    n = x.size

    # Small-input bypass: fixed kernel-launch + DMA-descriptor overhead dwarfs
    # the data movement for KB-scale inputs.
    if x.nbytes < min_pallas_bytes:
        return x

    # Flatten and pad to a multiple of 128 so every input (any rank / any size)
    # takes the same lane-dense, pipelined path.  Padding is layout plumbing.
    x_flat = x.reshape(-1)
    pad = (-n) % _LANES
    if pad:
        x_flat = jnp.pad(x_flat, (0, pad))
    n_padded = n + pad

    # Wide lane-dense view: long contiguous DMA bursts, fully unmasked stores.
    width = _pick_width(n_padded)
    rows = n_padded // width
    x2 = x_flat.reshape(rows, width)

    # Byte-budgeted, dtype-aware row tiling (~2 MiB per input tile).
    itemsize = jnp.dtype(x.dtype).itemsize
    tb = max(8, (_TILE_BYTES // (width * itemsize)) // 8 * 8)
    if rows <= tb:
        tb = rows  # single full-array block (exempt from the (8,128) rule)
    grid = (pl.cdiv(rows, tb),)

    out = pl.pallas_call(
        _copy_kernel,
        out_shape=jax.ShapeDtypeStruct((rows, width), x.dtype),
        grid=grid,
        in_specs=[pl.BlockSpec((tb, width), lambda i: (i, 0))],
        out_specs=pl.BlockSpec((tb, width), lambda i: (i, 0)),
        compiler_params=pltpu.CompilerParams(
            # TODO(synk): on v7x, pltpu.CORE_PARALLEL on this axis can shard the
            # copy across both TensorCores (~2x effective copy bandwidth); kept
            # "parallel" here so the same kernel compiles on single-TC v5e/v6e.
            dimension_semantics=("parallel",),
        ),
        cost_estimate=pl.CostEstimate(
            flops=0, transcendentals=0, bytes_accessed=2 * n_padded * itemsize),
    )(x2)

    out_flat = out.reshape(-1)
    if pad:
        out_flat = out_flat[:n]
    return out_flat.reshape(orig_shape)


class IdentityRepresentation:
    """Mirror of the PyTorch module: `dim` property + identity forward."""

    def __init__(self, input_dim: int):
        self._dim = int(input_dim)

    @property
    def dim(self) -> int:
        return self._dim

    def __call__(self, inputs: jnp.ndarray) -> jnp.ndarray:
        return identity_representation(inputs)


if __name__ == "__main__":
    key = jax.random.PRNGKey(0)
    # input_space = gym.spaces.Box(shape=(32,)) -> dim = 32; batch of 8 inputs.
    batch, dim = 8, 32
    x = jax.random.normal(key, (batch, dim), dtype=jnp.float32)

    rep = IdentityRepresentation(dim)
    assert rep.dim == dim

    # Primary (recommended) path: pure passthrough — no kernel at all.
    y_fast = jax.block_until_ready(rep(x))
    assert y_fast.shape == x.shape and y_fast.dtype == x.dtype
    assert bool(jnp.array_equal(y_fast, x))

    # Pallas copy path, forced even for the small demo input (128-divisible size).
    y_kernel = jax.block_until_ready(identity_copy_pallas(x, min_pallas_bytes=0))
    assert y_kernel.shape == x.shape and y_kernel.dtype == x.dtype
    assert bool(jnp.array_equal(y_kernel, x))

    # Pallas copy path on a non-128-divisible bf16 input (pad + slice back path).
    x2 = jax.random.normal(jax.random.PRNGKey(1), (7, 33), dtype=jnp.bfloat16)
    y2 = jax.block_until_ready(identity_copy_pallas(x2, min_pallas_bytes=0))
    assert y2.shape == x2.shape and y2.dtype == x2.dtype
    assert bool(jnp.array_equal(y2, x2))

    # Default-threshold call on the small input takes the zero-cost bypass.
    y_bypass = jax.block_until_ready(identity_copy_pallas(x))
    assert bool(jnp.array_equal(y_bypass, x))

    print("KERNEL_OK")
</pallas_src>

<mosaic_0001>
module attributes {stable_mosaic.version = 11 : i64} {
  func.func @_copy_kernel(%arg0: i32, %arg1: memref<1x256xf32, #tpu.memory_space<vmem>>, %arg2: memref<1x256xf32, #tpu.memory_space<vmem>>) attributes {dimension_semantics = [#tpu.dimension_semantics<parallel>], iteration_bounds = array<i64: 1>, scalar_prefetch = 0 : i64, scratch_operands = 0 : i64, tpu.core_type = #tpu.core_type<tc>, window_params = [{transform_indices = @transform_0, window_bounds = array<i64: 1, 256>}, {transform_indices = @transform_1, window_bounds = array<i64: 1, 256>}]} {
    %c0 = arith.constant 0 : index
    %c0_0 = arith.constant 0 : index
    %0 = vector.load %arg1[%c0, %c0_0] : memref<1x256xf32, #tpu.memory_space<vmem>>, vector<1x256xf32>
    %c0_1 = arith.constant 0 : index
    %c0_2 = arith.constant 0 : index
    %1 = vector.load %arg2[%c0_1, %c0_2] : memref<1x256xf32, #tpu.memory_space<vmem>>, vector<1x256xf32>
    tpu.vector_store %arg2[%c0_1, %c0_2], %0 {strides = array<i32>} : memref<1x256xf32, #tpu.memory_space<vmem>>, vector<1x256xf32>,
    return
  }
  func.func @transform_0(%arg0: i32) -> (i32, i32) {
    %c0_i32 = arith.constant 0 : i32
    %c0_i32_0 = arith.constant 0 : i32
    return %arg0, %c0_i32 : i32, i32
  }
  func.func @transform_1(%arg0: i32) -> (i32, i32) {
    %c0_i32 = arith.constant 0 : i32
    %c0_i32_0 = arith.constant 0 : i32
    return %arg0, %c0_i32 : i32, i32
  }
}

</mosaic_0001>

<llo_original>
// kernel: tpu_custom_call.1
$region0: #{tpu_custom_call.1}
  #allocation0 [shape = 'u32[]', space=smem, size = 0x4, offset = 0x4, fixed_abs, tag = 'smem constant byte address 0x4 - core index']
  #allocation1 [shape = 'u32[144,128]{1,0:T(1,128)}', space=vmem, size = 0x12000, scoped, tag = 'internal scratch']
  %s0 = inlined_call_operand.hbm [shape: f32[1,256], index: 0, kind: input, shape index: {}]
  %s1 = inlined_call_operand.hbm [shape: f32[1,256], index: 1, kind: output, shape index: {}]
  %s2 = sld [smem:[#allocation0]]
  $region18: #{tpu_custom_call.1} parent=0
    _
  %s4 = ssub.s32 1, %s2
  %s5 = scalar_select 0, %s4, %s2
  $region1: #{tpu_custom_call.1} parent=0
    #allocation2 [shape = 'u8[1024]{0}', space=vmem, size = 0x400, scoped, tag = 'input window, operand 0, single buffered']
    #allocation3 [shape = 's32[1]{0}', space=sflag, size = 0x4, scoped, tag = 'scoped memory for tpu_custom_call.1']
    #allocation4 [shape = 's32[1]{0}', space=sflag, size = 0x4, scoped, tag = 'scoped memory for tpu_custom_call.1']
    #allocation5 [shape = 'u8[1024]{0}', space=vmem, size = 0x400, scoped, tag = 'output window, operand 0, single buffered']
    %6 = vsyncpa [#allocation3], 0
    %7 = vsyncpa [#allocation4], 0
    // Predicated region
    $region2: #{tpu_custom_call.1} parent=1 // pred_check
      _
    $region3: #{tpu_custom_call.1} parent=1 // pred_check_branch
      %9 = sbr.rel (0) target = $region5
    $region4: #{tpu_custom_call.1} parent=1 // pred_region
      %s11 = ssub.s32 32, 32
      %12 = vsyncadd [#allocation3], %s11
      %s14 = sshll.u32 [#allocation2], 4
      %s15 = int_to_ptr.vmem [resolvable:$true] %s14
      %17 = dma.hbm_to_vmem [thread:$0]  %s0, 32, %s15, [#allocation3]
    $region5: #{tpu_custom_call.1} parent=1 // pred_fallthru
      _
    // Predicated region
    $region6: #{tpu_custom_call.1} parent=1 // pred_check
      _
    $region7: #{tpu_custom_call.1} parent=1 // pred_check_branch
      %19 = sbr.rel (0) target = $region9
    $region8: #{tpu_custom_call.1} parent=1 // pred_region
      %20 = dma.done [#allocation3], 32
    $region9: #{tpu_custom_call.1} parent=1 // pred_fallthru
      _
    %v21 = vld [vmem:[#allocation2] sm:$0x3]
    %v22 = vlaneseq
    %vm23 = vcmp.ge.s32.totalorder %v22, 0
    %vm24 = vcmp.lt.s32.totalorder %v22, 256
    %vm25 = vmand %vm23, %vm24
    %26 = vst.msk [vmem:[#allocation5] sm:$0x3] %vm25, %v21
    // Predicated region
    $region10: #{tpu_custom_call.1} parent=1 // pred_check
      _
    $region11: #{tpu_custom_call.1} parent=1 // pred_check_branch
      %28 = sbr.rel (0) target = $region13
    $region12: #{tpu_custom_call.1} parent=1 // pred_region
      %s30 = ssub.s32 32, 32
      %31 = vsyncadd [#allocation4], %s30
      %s33 = sshll.u32 [#allocation5], 4
      %s34 = int_to_ptr.vmem [resolvable:$true] %s33
      %36 = dma.vmem_to_hbm [thread:$0]  %s34, 32, %s1, [#allocation4]
    $region13: #{tpu_custom_call.1} parent=1 // pred_fallthru
      _
    // Predicated region
    $region14: #{tpu_custom_call.1} parent=1 // pred_check
      _
    $region15: #{tpu_custom_call.1} parent=1 // pred_check_branch
      %38 = sbr.rel (0) target = $region17
    $region16: #{tpu_custom_call.1} parent=1 // pred_region
      %39 = dma.done [#allocation4], 32
    $region17: #{tpu_custom_call.1} parent=1 // pred_fallthru
      _
    %40 = vsyncpa [#allocation3], 1
    %41 = vsyncpa [#allocation4], 1

</llo_original>
